<compile_context>
chip_gen: v7x
topology: tpu7x:2x2x1
jax: 0.10.0
libtpu: 0.0.40
codegen_flags: <defaults>
</compile_context>

<pallas_src>
import functools

import jax
import jax.numpy as jnp
from jax import lax
from jax.experimental import pallas as pl
from jax.experimental.pallas import tpu as pltpu


def _self_attention_kernel(x_q_ref, x_k_ref, w_ref, gbv_ref, out_ref,
                           m_ref, l_ref, acc_ref, *, c, cp):
    """One (batch, q-tile, k-tile) grid step of fused self-attention.

    x_q_ref : (C, tq)       query-side input tile (resident across k tiles)
    x_k_ref : (C, tk)       key/value-side input tile
    w_ref   : (Cp + C, C)   stacked weights: [Wq^T Wk ; bq^T Wk ; 0-pad ; g*Wv]
    gbv_ref : (C, 1)        gamma * value bias
    out_ref : (C, tq)
    m/l/acc : VMEM scratch  running max (1,tq), running sum (1,tq), acc (C,tq)
    """
    ki = pl.program_id(2)
    f32 = jnp.float32
    bf16 = jnp.bfloat16

    @pl.when(ki == 0)
    def _():
        m_ref[...] = jnp.full_like(m_ref, -jnp.inf)
        l_ref[...] = jnp.zeros_like(l_ref)
        acc_ref[...] = jnp.zeros_like(acc_ref)

    # Single fused projection matmul for this key tile (kept in f32: M = Cp+C
    # under-fills the MXU anyway, and it preserves the fused q/k accuracy):
    #   rows [0:c)     -> (Wq^T Wk) x_k
    #   row  c         -> bq^T (Wk x_k)          (only energy-bias term that
    #                                             survives the softmax over m)
    #   rows [c+1:cp)  -> 0                      (sublane alignment padding)
    #   rows [cp:cp+c) -> gamma * (Wv x_k)       (value projection)
    x_k = x_k_ref[...].astype(f32)
    proj = jnp.dot(w_ref[...], x_k, preferred_element_type=f32)      # (cp+c, tk)
    kk = proj[:cp, :].astype(bf16)                                   # (cp, tk)
    v = proj[cp:, :].astype(bf16)                                    # (c,  tk)

    # Query tile augmented with a ones row (bias lane) + zero rows up to cp.
    x_q = x_q_ref[...].astype(f32)                                   # (c, tq)
    tq = x_q.shape[1]
    row = lax.broadcasted_iota(jnp.int32, (cp - c, tq), 0)
    aug = (row == 0).astype(f32)                                     # (cp-c, tq)
    x_q_aug = jnp.concatenate([x_q, aug], axis=0).astype(bf16)       # (cp, tq)

    # Transposed energy tile: e_t[m, n] = q_n . k_m  (softmax axis = sublanes).
    e_t = lax.dot_general(kk, x_q_aug, (((0,), (0,)), ((), ())),
                          preferred_element_type=f32)                # (tk, tq)

    # Online softmax update (statistics in f32).
    m_prev = m_ref[...]
    m_new = jnp.maximum(m_prev, jnp.max(e_t, axis=0, keepdims=True))
    alpha = jnp.exp(m_prev - m_new)                                  # (1, tq)
    p = jnp.exp(e_t - m_new)                                         # (tk, tq)
    l_ref[...] = alpha * l_ref[...] + jnp.sum(p, axis=0, keepdims=True)
    acc_ref[...] = alpha * acc_ref[...] + jnp.dot(
        v, p.astype(bf16), preferred_element_type=f32)               # (c, tq)
    m_ref[...] = m_new

    @pl.when(ki == pl.num_programs(2) - 1)
    def _():
        # Attention rows sum to 1, so gamma*bv is added exactly once here.
        inv_l = pl.reciprocal(l_ref[...], approx=True)               # EUP slot
        out = acc_ref[...] * inv_l + gbv_ref[...] + x_q_ref[...].astype(f32)
        out_ref[...] = out.astype(out_ref.dtype)


def _pick_tile(n, preferred):
    # Tiles must be a multiple of 128 lanes or span the full axis ((8,128) rule).
    if n <= preferred:
        return n
    for t in range(preferred, 127, -128):
        if t % 128 == 0 and n % t == 0:
            return t
    # TODO(synk): for huge N not divisible by 128 this falls back to an untiled
    # axis; padding/masking the ragged tail would bound VMEM in that case too.
    return n


def self_attention(x, wq, bq, wk, bk, wv, bv, gamma, *, q_tile=512, k_tile=512):
    """Pallas TPU forward of PointNetGPD SelfAttention. x: (B, C, N)."""
    B, C, N = x.shape
    f32 = jnp.float32
    cp = -(-(C + 1) // 8) * 8                       # C+1 rounded up to sublanes

    tq = _pick_tile(N, q_tile)
    tk = _pick_tile(N, k_tile)
    n_q, n_k = N // tq, N // tk

    g = jnp.reshape(gamma, (-1,))[0].astype(f32)
    # energy[n, m] = x_n^T (Wq^T Wk) x_m + bq^T Wk x_m  (+ terms constant in m,
    # which cancel in the softmax over m and are therefore dropped).
    a = wq.astype(f32).T @ wk.astype(f32)                            # (C, C)
    w_row = (wk.astype(f32).T @ bq.astype(f32)).T                    # (1, C)
    pad = jnp.zeros((cp - (C + 1), C), f32)
    wv_g = g * wv.astype(f32)                                        # (C, C)
    w_proj = jnp.concatenate([a, w_row, pad, wv_g], axis=0)          # (cp+C, C)
    gbv = (g * bv.astype(f32)).reshape(C, 1)                         # (C, 1)

    # Advisory cost estimate so XLA schedules neighbours of this call sensibly.
    flops = int(B * (n_q * 2 * N * C * (cp + C) + 2 * N * N * (cp + C)))
    transcendentals = int(B * N * N)
    bytes_accessed = int(4 * (B * C * N * (2 + n_q) + (cp + C) * C + C))
    cost = pl.CostEstimate(flops=flops, transcendentals=transcendentals,
                           bytes_accessed=bytes_accessed)

    out = pl.pallas_call(
        functools.partial(_self_attention_kernel, c=C, cp=cp),
        out_shape=jax.ShapeDtypeStruct((B, C, N), x.dtype),
        grid_spec=pltpu.PrefetchScalarGridSpec(
            num_scalar_prefetch=0,
            grid=(B, n_q, n_k),
            in_specs=[
                pl.BlockSpec((None, C, tq), lambda b, qi, ki: (b, 0, qi)),  # q side
                pl.BlockSpec((None, C, tk), lambda b, qi, ki: (b, 0, ki)),  # k/v side
                pl.BlockSpec((cp + C, C), lambda b, qi, ki: (0, 0)),        # fused W
                pl.BlockSpec((C, 1), lambda b, qi, ki: (0, 0)),             # gamma*bv
            ],
            out_specs=pl.BlockSpec((None, C, tq), lambda b, qi, ki: (b, 0, qi)),
            scratch_shapes=[
                pltpu.VMEM((1, tq), jnp.float32),   # running max
                pltpu.VMEM((1, tq), jnp.float32),   # running sum
                pltpu.VMEM((C, tq), jnp.float32),   # output accumulator
            ],
        ),
        compiler_params=pltpu.CompilerParams(
            # Shard batch / q-tiles across v7x's two TensorCores; k is reduced.
            dimension_semantics=("parallel", "parallel", "arbitrary"),
            # Tiling bounds actual usage; this just gives headroom for big tiles.
            vmem_limit_bytes=64 * 1024 * 1024,
        ),
        cost_estimate=cost,
    )(x, x, w_proj, gbv)
    return out


def self_attention_ref(x, wq, bq, wk, bk, wv, bv, gamma):
    # Pure-JAX reference mirroring the PyTorch forward (unfused).
    q = jnp.einsum("oc,bcn->bon", wq, x) + bq[None, :, :]            # (B, Cq, N)
    k = jnp.einsum("oc,bcn->bon", wk, x) + bk[None, :, :]            # (B, Cq, N)
    v = jnp.einsum("oc,bcn->bon", wv, x) + bv[None, :, :]            # (B, C, N)
    energy = jnp.einsum("bcn,bcm->bnm", q, k)                        # (B, N, N)
    attn = jax.nn.softmax(energy, axis=-1)
    out = jnp.einsum("bcm,bnm->bcn", v, attn)                        # (B, C, N)
    return jnp.reshape(gamma, (-1,))[0] * out + x


if __name__ == "__main__":
    B, C, N = 2, 32, 64
    Cq = C // 8

    key = jax.random.PRNGKey(0)
    ks = jax.random.split(key, 7)
    x = jax.random.normal(ks[0], (B, C, N), dtype=jnp.float32)

    # Deterministic parameter init (Conv1d kernel_size=1 => weight (out, in)).
    wq = jax.random.normal(ks[1], (Cq, C), dtype=jnp.float32) * 0.1
    bq = jax.random.normal(ks[2], (Cq, 1), dtype=jnp.float32) * 0.1
    wk = jax.random.normal(ks[3], (Cq, C), dtype=jnp.float32) * 0.1
    bk = jax.random.normal(ks[4], (Cq, 1), dtype=jnp.float32) * 0.1
    wv = jax.random.normal(ks[5], (C, C), dtype=jnp.float32) * 0.1
    bv = jax.random.normal(ks[6], (C, 1), dtype=jnp.float32) * 0.1
    # nn.Parameter(torch.zeros(1)) in the module; nonzero here so the attention
    # path is actually exercised.
    gamma = jnp.full((1, 1), 0.5, dtype=jnp.float32)

    fwd = jax.jit(self_attention)
    out = jax.block_until_ready(fwd(x, wq, bq, wk, bk, wv, bv, gamma))

    ref = self_attention_ref(x, wq, bq, wk, bk, wv, bv, gamma)
    assert out.shape == (B, C, N)
    # 2e-2 tolerance covers the bf16 MXU operands on the O(N^2) matmuls, the
    # EUP approximate reciprocal in the softmax normalization, and the
    # reassociated (fused) projections; a structural bug would produce errors
    # orders of magnitude larger.
    assert jnp.allclose(out, ref, atol=2e-2, rtol=2e-2), (
        float(jnp.max(jnp.abs(out - ref))))

    print("KERNEL_OK")
</pallas_src>

<mosaic_0001>
module attributes {stable_mosaic.version = 11 : i64} {
  func.func @_self_attention_kernel(%arg0: i32, %arg1: i32, %arg2: i32, %arg3: memref<1x32x64xf32, #tpu.memory_space<vmem>>, %arg4: memref<1x32x64xf32, #tpu.memory_space<vmem>>, %arg5: memref<72x32xf32, #tpu.memory_space<vmem>>, %arg6: memref<32x1xf32, #tpu.memory_space<vmem>>, %arg7: memref<1x32x64xf32, #tpu.memory_space<vmem>>, %arg8: memref<1x64xf32, #tpu.memory_space<vmem>>, %arg9: memref<1x64xf32, #tpu.memory_space<vmem>>, %arg10: memref<32x64xf32, #tpu.memory_space<vmem>>) attributes {dimension_semantics = [#tpu.dimension_semantics<parallel>, #tpu.dimension_semantics<parallel>, #tpu.dimension_semantics<arbitrary>], iteration_bounds = array<i64: 2, 1, 1>, scalar_prefetch = 0 : i64, scratch_operands = 3 : i64, tpu.core_type = #tpu.core_type<tc>, window_params = [{transform_indices = @transform_0, window_bounds = array<i64: 1, 32, 64>}, {transform_indices = @transform_1, window_bounds = array<i64: 1, 32, 64>}, {pipeline_mode = #tpu.pipeline_mode<synchronous>, transform_indices = @transform_2, window_bounds = array<i64: 72, 32>}, {pipeline_mode = #tpu.pipeline_mode<synchronous>, transform_indices = @transform_3, window_bounds = array<i64: 32, 1>}, {transform_indices = @transform_4, window_bounds = array<i64: 1, 32, 64>}]} {
    %c0_i32 = arith.constant 0 : i32
    %0 = arith.cmpi eq, %arg2, %c0_i32 : i32
    %1 = arith.extui %0 : i1 to i32
    %c0_i32_0 = arith.constant 0 : i32
    %2 = arith.cmpi ne, %1, %c0_i32_0 : i32
    scf.if %2 {
      %cst_27 = arith.constant 0xFF800000 : f32
      %47 = vector.broadcast %cst_27 : f32 to vector<1x64xf32>
      %c0_28 = arith.constant 0 : index
      %c0_29 = arith.constant 0 : index
      %48 = vector.load %arg8[%c0_28, %c0_29] : memref<1x64xf32, #tpu.memory_space<vmem>>, vector<1x64xf32>
      tpu.vector_store %arg8[%c0_28, %c0_29], %47 {strides = array<i32>} : memref<1x64xf32, #tpu.memory_space<vmem>>, vector<1x64xf32>,
      %cst_30 = arith.constant 0.000000e+00 : f32
      %49 = vector.broadcast %cst_30 : f32 to vector<1x64xf32>
      %c0_31 = arith.constant 0 : index
      %c0_32 = arith.constant 0 : index
      %50 = vector.load %arg9[%c0_31, %c0_32] : memref<1x64xf32, #tpu.memory_space<vmem>>, vector<1x64xf32>
      tpu.vector_store %arg9[%c0_31, %c0_32], %49 {strides = array<i32>} : memref<1x64xf32, #tpu.memory_space<vmem>>, vector<1x64xf32>,
      %cst_33 = arith.constant 0.000000e+00 : f32
      %51 = vector.broadcast %cst_33 : f32 to vector<32x64xf32>
      %c0_34 = arith.constant 0 : index
      %c0_35 = arith.constant 0 : index
      %52 = vector.load %arg10[%c0_34, %c0_35] : memref<32x64xf32, #tpu.memory_space<vmem>>, vector<32x64xf32>
      tpu.vector_store %arg10[%c0_34, %c0_35], %51 {strides = array<i32>} : memref<32x64xf32, #tpu.memory_space<vmem>>, vector<32x64xf32>,
    } else {
    }
    %c0 = arith.constant 0 : index
    %c0_1 = arith.constant 0 : index
    %c0_2 = arith.constant 0 : index
    %3 = vector.load %arg4[%c0, %c0_1, %c0_2] : memref<1x32x64xf32, #tpu.memory_space<vmem>>, vector<1x32x64xf32>
    %4 = vector.shape_cast %3 : vector<1x32x64xf32> to vector<32x64xf32>
    %c0_3 = arith.constant 0 : index
    %c0_4 = arith.constant 0 : index
    %5 = vector.load %arg5[%c0_3, %c0_4] : memref<72x32xf32, #tpu.memory_space<vmem>>, vector<72x32xf32>
    %cst = arith.constant dense<0.000000e+00> : vector<72x64xf32>
    %6 = tpu.matmul %5, %4, %cst {dimension_numbers = #tpu.dot_dimension_numbers<[1], [0], [0], [1], [0, 0, 1, 1], [], []>} : vector<72x32xf32>, vector<32x64xf32>, vector<72x64xf32> -> vector<72x64xf32>
    %7 = vector.extract_strided_slice %6 {offsets = [0, 0], sizes = [40, 64], strides = [1, 1]} : vector<72x64xf32> to vector<40x64xf32>
    %8 = arith.truncf %7 : vector<40x64xf32> to vector<40x64xbf16>
    %9 = vector.extract_strided_slice %6 {offsets = [40, 0], sizes = [32, 64], strides = [1, 1]} : vector<72x64xf32> to vector<32x64xf32>
    %10 = arith.truncf %9 : vector<32x64xf32> to vector<32x64xbf16>
    %c0_5 = arith.constant 0 : index
    %c0_6 = arith.constant 0 : index
    %c0_7 = arith.constant 0 : index
    %11 = vector.load %arg3[%c0_5, %c0_6, %c0_7] : memref<1x32x64xf32, #tpu.memory_space<vmem>>, vector<1x32x64xf32>
    %12 = vector.shape_cast %11 : vector<1x32x64xf32> to vector<32x64xf32>
    %13 = tpu.iota {dimensions = array<i32: 0>} : vector<8x64xi32>
    %c0_i32_8 = arith.constant 0 : i32
    %14 = vector.broadcast %c0_i32_8 : i32 to vector<8x64xi32>
    %15 = arith.cmpi eq, %13, %14 : vector<8x64xi32>
    %16 = arith.extui %15 : vector<8x64xi1> to vector<8x64xi32>
    %17 = arith.sitofp %16 : vector<8x64xi32> to vector<8x64xf32>
    %18 = tpu.concatenate %12, %17 in 0 : vector<32x64xf32>, vector<8x64xf32> -> vector<40x64xf32>
    %19 = arith.truncf %18 : vector<40x64xf32> to vector<40x64xbf16>
    %cst_9 = arith.constant dense<0.000000e+00> : vector<64x64xf32>
    %20 = tpu.matmul %8, %19, %cst_9 {dimension_numbers = #tpu.dot_dimension_numbers<[0], [0], [1], [1], [0, 1, 1, 1], [], []>} : vector<40x64xbf16>, vector<40x64xbf16>, vector<64x64xf32> -> vector<64x64xf32>
    %c0_10 = arith.constant 0 : index
    %c0_11 = arith.constant 0 : index
    %21 = vector.load %arg8[%c0_10, %c0_11] : memref<1x64xf32, #tpu.memory_space<vmem>>, vector<1x64xf32>
    %cst_12 = arith.constant dense<0xFF800000> : vector<64xf32>
    %22 = vector.multi_reduction <maximumf>, %20, %cst_12 [0] : vector<64x64xf32> to vector<64xf32>
    %23 = vector.shape_cast %22 : vector<64xf32> to vector<1x64xf32>
    %24 = arith.maximumf %21, %23 : vector<1x64xf32>
    %25 = arith.subf %21, %24 : vector<1x64xf32>
    %26 = math.exp %25 : vector<1x64xf32>
    %27 = vector.broadcast %24 : vector<1x64xf32> to vector<64x64xf32>
    %28 = arith.subf %20, %27 : vector<64x64xf32>
    %29 = math.exp %28 : vector<64x64xf32>
    %c0_13 = arith.constant 0 : index
    %c0_14 = arith.constant 0 : index
    %30 = vector.load %arg9[%c0_13, %c0_14] : memref<1x64xf32, #tpu.memory_space<vmem>>, vector<1x64xf32>
    %31 = arith.mulf %26, %30 : vector<1x64xf32>
    %cst_15 = arith.constant dense<0.000000e+00> : vector<64xf32>
    %32 = vector.multi_reduction <add>, %29, %cst_15 [0] : vector<64x64xf32> to vector<64xf32>
    %33 = vector.shape_cast %32 : vector<64xf32> to vector<1x64xf32>
    %34 = arith.addf %31, %33 : vector<1x64xf32>
    %c0_16 = arith.constant 0 : index
    %c0_17 = arith.constant 0 : index
    %35 = vector.load %arg9[%c0_16, %c0_17] : memref<1x64xf32, #tpu.memory_space<vmem>>, vector<1x64xf32>
    tpu.vector_store %arg9[%c0_16, %c0_17], %34 {strides = array<i32>} : memref<1x64xf32, #tpu.memory_space<vmem>>, vector<1x64xf32>,
    %c0_18 = arith.constant 0 : index
    %c0_19 = arith.constant 0 : index
    %36 = vector.load %arg10[%c0_18, %c0_19] : memref<32x64xf32, #tpu.memory_space<vmem>>, vector<32x64xf32>
    %37 = vector.broadcast %26 : vector<1x64xf32> to vector<32x64xf32>
    %38 = arith.mulf %37, %36 : vector<32x64xf32>
    %39 = arith.truncf %29 : vector<64x64xf32> to vector<64x64xbf16>
    %cst_20 = arith.constant dense<0.000000e+00> : vector<32x64xf32>
    %40 = tpu.matmul %10, %39, %cst_20 {dimension_numbers = #tpu.dot_dimension_numbers<[1], [0], [0], [1], [0, 0, 1, 1], [], []>} : vector<32x64xbf16>, vector<64x64xbf16>, vector<32x64xf32> -> vector<32x64xf32>
    %41 = arith.addf %38, %40 : vector<32x64xf32>
    %c0_21 = arith.constant 0 : index
    %c0_22 = arith.constant 0 : index
    %42 = vector.load %arg10[%c0_21, %c0_22] : memref<32x64xf32, #tpu.memory_space<vmem>>, vector<32x64xf32>
    tpu.vector_store %arg10[%c0_21, %c0_22], %41 {strides = array<i32>} : memref<32x64xf32, #tpu.memory_space<vmem>>, vector<32x64xf32>,
    %c0_23 = arith.constant 0 : index
    %c0_24 = arith.constant 0 : index
    %43 = vector.load %arg8[%c0_23, %c0_24] : memref<1x64xf32, #tpu.memory_space<vmem>>, vector<1x64xf32>
    tpu.vector_store %arg8[%c0_23, %c0_24], %24 {strides = array<i32>} : memref<1x64xf32, #tpu.memory_space<vmem>>, vector<1x64xf32>,
    %c0_i32_25 = arith.constant 0 : i32
    %44 = arith.cmpi eq, %arg2, %c0_i32_25 : i32
    %45 = arith.extui %44 : i1 to i32
    %c0_i32_26 = arith.constant 0 : i32
    %46 = arith.cmpi ne, %45, %c0_i32_26 : i32
    scf.if %46 {
      %c0_27 = arith.constant 0 : index
      %c0_28 = arith.constant 0 : index
      %47 = vector.load %arg9[%c0_27, %c0_28] : memref<1x64xf32, #tpu.memory_space<vmem>>, vector<1x64xf32>
      %48 = tpu.reciprocal %47 {approx = true} : vector<1x64xf32> -> vector<1x64xf32>
      %c0_29 = arith.constant 0 : index
      %c0_30 = arith.constant 0 : index
      %49 = vector.load %arg10[%c0_29, %c0_30] : memref<32x64xf32, #tpu.memory_space<vmem>>, vector<32x64xf32>
      %50 = vector.broadcast %48 : vector<1x64xf32> to vector<32x64xf32>
      %51 = arith.mulf %49, %50 : vector<32x64xf32>
      %c0_31 = arith.constant 0 : index
      %c0_32 = arith.constant 0 : index
      %52 = vector.load %arg6[%c0_31, %c0_32] : memref<32x1xf32, #tpu.memory_space<vmem>>, vector<32x1xf32>
      %53 = vector.broadcast %52 : vector<32x1xf32> to vector<32x64xf32>
      %54 = arith.addf %51, %53 : vector<32x64xf32>
      %c0_33 = arith.constant 0 : index
      %c0_34 = arith.constant 0 : index
      %c0_35 = arith.constant 0 : index
      %55 = vector.load %arg3[%c0_33, %c0_34, %c0_35] : memref<1x32x64xf32, #tpu.memory_space<vmem>>, vector<1x32x64xf32>
      %56 = vector.shape_cast %55 : vector<1x32x64xf32> to vector<32x64xf32>
      %57 = arith.addf %54, %56 : vector<32x64xf32>
      %c0_36 = arith.constant 0 : index
      %c0_37 = arith.constant 0 : index
      %c0_38 = arith.constant 0 : index
      %58 = vector.load %arg7[%c0_36, %c0_37, %c0_38] : memref<1x32x64xf32, #tpu.memory_space<vmem>>, vector<1x32x64xf32>
      %59 = vector.shape_cast %58 : vector<1x32x64xf32> to vector<32x64xf32>
      %60 = vector.shape_cast %57 : vector<32x64xf32> to vector<1x32x64xf32>
      tpu.vector_store %arg7[%c0_36, %c0_37, %c0_38], %60 {strides = array<i32>} : memref<1x32x64xf32, #tpu.memory_space<vmem>>, vector<1x32x64xf32>,
    } else {
    }
    return
  }
  func.func @transform_0(%arg0: i32, %arg1: i32, %arg2: i32) -> (i32, i32, i32) {
    %c0_i32 = arith.constant 0 : i32
    %c0_i32_0 = arith.constant 0 : i32
    return %arg0, %c0_i32, %arg1 : i32, i32, i32
  }
  func.func @transform_1(%arg0: i32, %arg1: i32, %arg2: i32) -> (i32, i32, i32) {
    %c0_i32 = arith.constant 0 : i32
    %c0_i32_0 = arith.constant 0 : i32
    return %arg0, %c0_i32, %arg2 : i32, i32, i32
  }
  func.func @transform_2(%arg0: i32, %arg1: i32, %arg2: i32) -> (i32, i32) {
    %c0_i32 = arith.constant 0 : i32
    %c0_i32_0 = arith.constant 0 : i32
    %c0_i32_1 = arith.constant 0 : i32
    return %c0_i32, %c0_i32_0 : i32, i32
  }
  func.func @transform_3(%arg0: i32, %arg1: i32, %arg2: i32) -> (i32, i32) {
    %c0_i32 = arith.constant 0 : i32
    %c0_i32_0 = arith.constant 0 : i32
    %c0_i32_1 = arith.constant 0 : i32
    return %c0_i32, %c0_i32_0 : i32, i32
  }
  func.func @transform_4(%arg0: i32, %arg1: i32, %arg2: i32) -> (i32, i32, i32) {
    %c0_i32 = arith.constant 0 : i32
    %c0_i32_0 = arith.constant 0 : i32
    return %arg0, %c0_i32, %arg1 : i32, i32, i32
  }
}

</mosaic_0001>

<llo_original>
// kernel: self_attention.1
$region0: #{self_attention.1}
  #allocation0 [shape = 'u32[]', space=smem, size = 0x4, offset = 0x4, fixed_abs, tag = 'smem constant byte address 0x4 - core index']
  #allocation1 [shape = 'u32[144,128]{1,0:T(1,128)}', space=vmem, size = 0x12000, scoped, tag = 'internal scratch']
  #allocation2 [shape = 'f32[1,64]{1,0:T(1,128)}', space=vmem, size = 0x200, scoped, tag = 'scratch operand']
  #allocation3 [shape = 'f32[1,64]{1,0:T(1,128)}', space=vmem, size = 0x200, scoped, tag = 'scratch operand']
  #allocation4 [shape = 'f32[32,64]{1,0:T(8,128)}', space=vmem, size = 0x4000, scoped, tag = 'scratch operand']
  %s0 = inlined_call_operand.hbm [shape: f32[2,32,64], index: 0, kind: input, shape index: {}, may-alias: {0,1}]
  %s1 = inlined_call_operand.hbm [shape: f32[2,32,64], index: 1, kind: input, shape index: {}, may-alias: {0,1}]
  %s2 = inlined_call_operand.hbm [shape: f32[72,32], index: 2, kind: input, shape index: {}]
  %s3 = inlined_call_operand.hbm [shape: f32[32,1], index: 3, kind: input, shape index: {}]
  %s4 = inlined_call_operand.hbm [shape: f32[2,32,64], index: 4, kind: output, shape index: {}]
  %s5 = sld [smem:[#allocation0]]
  $region73: #{self_attention.1} parent=0
    _
  %s7 = ssub.s32 1, %s5
  %s8 = scalar_select 0, %s7, %s5
  $region1: #{self_attention.1} parent=0
    #allocation5 [shape = 'u8[32768]{0}', space=vmem, size = 0x8000, scoped, tag = 'input window, operand 0']
    #allocation6 [shape = 's32[2]{0}', space=sflag, size = 0x8, scoped, tag = 'scoped memory for self_attention.1']
    #allocation7 [shape = 's32[2]{0}', space=sflag, size = 0x8, scoped, tag = 'scoped memory for self_attention.1']
    #allocation8 [shape = 'u8[32768]{0}', space=vmem, size = 0x8000, scoped, tag = 'input window, operand 1']
    #allocation9 [shape = 's32[2]{0}', space=sflag, size = 0x8, scoped, tag = 'scoped memory for self_attention.1']
    #allocation10 [shape = 'u8[36864]{0}', space=vmem, size = 0x9000, scoped, tag = 'input window, operand 2, single buffered']
    #allocation11 [shape = 'u8[16384]{0}', space=vmem, size = 0x4000, scoped, tag = 'input window, operand 3, single buffered']
    #allocation12 [shape = 's32[1]{0}', space=sflag, size = 0x4, scoped, tag = 'scoped memory for self_attention.1']
    #allocation13 [shape = 'u8[32768]{0}', space=vmem, size = 0x8000, scoped, tag = 'output window, operand 0']
    %9 = vsyncpa [#allocation6], 0
    %s10 = scalar_lea.sflag [#allocation6], 1
    %11 = vsyncpa %s10, 0
    %12 = vsyncpa [#allocation9], 0
    %s13 = scalar_lea.sflag [#allocation9], 1
    %14 = vsyncpa %s13, 0
    %15 = vsyncpa [#allocation12], 0
    %16 = vsyncpa [#allocation7], 0
    %s17 = scalar_lea.sflag [#allocation7], 1
    %18 = vsyncpa %s17, 0
    loop: start=0, step=1, limit=4
    $region2: #{self_attention.1} parent=1 // loop_pre_header
      _
    $region3: #{self_attention.1} parent=1 // loop_header
      %s20 = sphi 0, %s24
      %p21 = scmp.ge.s32.totalorder %s20, 4
      %s27 = sphi 0, %s46
      %s28 = sphi 0, %s42
      %s29 = sphi 0, %s38
      %s30 = sphi 0, %s27
      %s31 = sphi 0, %s28
      %s32 = sphi 0, %s29
      %s33 = sphi 0, %s30
      %s34 = sphi 0, %s31
      %s35 = sphi 0, %s32
      %s51 = sphi 0, %s53
      %s54 = sphi 0, %s51
      %s55 = sphi 0, %s54
      %s71 = sphi 0, %s55
      %s79 = sphi 0, %s81
      %s82 = sphi 0, %s79
      %s83 = sphi 0, %s82
      %s99 = sphi 0, %s83
      %s103 = sphi 0, %s103
      %s105 = sphi 0, %s103
      %s106 = sphi 0, %s105
      %s120 = sphi 0, %s106
      %s124 = sphi 0, %s124
      %s126 = sphi 0, %s124
      %s127 = sphi 0, %s126
      %s141 = sphi 0, %s127
      %s149 = sphi 0, %s151
      %s152 = sphi 0, %s149
      %s153 = sphi 0, %s152
      %s169 = sphi 0, %s153
    $region4: #{self_attention.1} parent=1 // loop_header_branch
      %23 = sbr.rel (%p21) target = $region8
    $region5: #{self_attention.1} parent=1 // loop_body
      %s25 = ssub.s32 %s20, 1
      %s26 = ssub.s32 %s20, 2
      %s36 = sadd.s32 1, %s29
      %p37 = scmp.ge.s32.totalorder %s36, 1
      %s38 = scalar_select %p37, 0, %s36
      %s39 = sadd.s32 1, %s28
      %s40 = scalar_select %p37, %s39, %s28
      %p41 = scmp.ge.s32.totalorder %s40, 1
      %s42 = scalar_select %p41, 0, %s40
      %s43 = sadd.s32 1, %s27
      %s44 = scalar_select %p41, %s43, %s27
      %p45 = scmp.ge.s32.totalorder %s44, 2
      %s46 = scalar_select %p45, 0, %s44
      %s47 = ssub.s32 %s27, %s46
      %s48 = ssub.s32 %s28, %s42
      %s49 = sor.u32 %s47, %s48
      %p50 = scmp.eq.s32.totalorder %s49, 0
      %s52 = sadd.s32 %s51, 1
      %s53 = scalar_select %p50, %s51, %s52
      %p56 = pneg %p50
      %p57 = scmp.eq.s32.totalorder %s20, 1
      %p58 = por %p56, %p57
      %p59 = scmp.ne.s32.totalorder %s51, %s54
      %p60 = scmp.eq.s32.totalorder %s20, 0
      %p61 = por %p59, %p60
      %p62 = scmp.ne.s32.totalorder %s51, %s54
      %p63 = scmp.eq.s32.totalorder %s25, 1
      %p64 = por %p62, %p63
      %p65 = scmp.ne.s32.totalorder %s54, %s55
      %p66 = scmp.eq.s32.totalorder %s25, 0
      %p67 = por %p65, %p66
      %p68 = scmp.ne.s32.totalorder %s54, %s55
      %p69 = scmp.eq.s32.totalorder %s26, 1
      %p70 = por %p68, %p69
      %p72 = scmp.ne.s32.totalorder %s55, %s71
      %p73 = scmp.eq.s32.totalorder %s26, 0
      %p74 = por %p72, %p73
      %s75 = ssub.s32 %s27, %s46
      %s76 = ssub.s32 %s29, %s38
      %s77 = sor.u32 %s75, %s76
      %p78 = scmp.eq.s32.totalorder %s77, 0
      %s80 = sadd.s32 %s79, 1
      %s81 = scalar_select %p78, %s79, %s80
      %p84 = pneg %p78
      %p85 = scmp.eq.s32.totalorder %s20, 1
      %p86 = por %p84, %p85
      %p87 = scmp.ne.s32.totalorder %s79, %s82
      %p88 = scmp.eq.s32.totalorder %s20, 0
      %p89 = por %p87, %p88
      %p90 = scmp.ne.s32.totalorder %s79, %s82
      %p91 = scmp.eq.s32.totalorder %s25, 1
      %p92 = por %p90, %p91
      %p93 = scmp.ne.s32.totalorder %s82, %s83
      %p94 = scmp.eq.s32.totalorder %s25, 0
      %p95 = por %p93, %p94
      %p96 = scmp.ne.s32.totalorder %s82, %s83
      %p97 = scmp.eq.s32.totalorder %s26, 1
      %p98 = por %p96, %p97
      %p100 = scmp.ne.s32.totalorder %s83, %s99
      %p101 = scmp.eq.s32.totalorder %s26, 0
      %p102 = por %p100, %p101
      %s104 = sadd.s32 %s103, 1
      %p107 = scmp.eq.s32.totalorder %s20, 1
      %p108 = scmp.ne.s32.totalorder %s103, %s105
      %p109 = scmp.eq.s32.totalorder %s20, 0
      %p110 = por %p108, %p109
      %p111 = scmp.ne.s32.totalorder %s103, %s105
      %p112 = scmp.eq.s32.totalorder %s25, 1
      %p113 = por %p111, %p112
      %p114 = scmp.ne.s32.totalorder %s105, %s106
      %p115 = scmp.eq.s32.totalorder %s25, 0
      %p116 = por %p114, %p115
      %p117 = scmp.ne.s32.totalorder %s105, %s106
      %p118 = scmp.eq.s32.totalorder %s26, 1
      %p119 = por %p117, %p118
      %p121 = scmp.ne.s32.totalorder %s106, %s120
      %p122 = scmp.eq.s32.totalorder %s26, 0
      %p123 = por %p121, %p122
      %s125 = sadd.s32 %s124, 1
      %p128 = scmp.eq.s32.totalorder %s20, 1
      %p129 = scmp.ne.s32.totalorder %s124, %s126
      %p130 = scmp.eq.s32.totalorder %s20, 0
      %p131 = por %p129, %p130
      %p132 = scmp.ne.s32.totalorder %s124, %s126
      %p133 = scmp.eq.s32.totalorder %s25, 1
      %p134 = por %p132, %p133
      %p135 = scmp.ne.s32.totalorder %s126, %s127
      %p136 = scmp.eq.s32.totalorder %s25, 0
      %p137 = por %p135, %p136
      %p138 = scmp.ne.s32.totalorder %s126, %s127
      %p139 = scmp.eq.s32.totalorder %s26, 1
      %p140 = por %p138, %p139
      %p142 = scmp.ne.s32.totalorder %s127, %s141
      %p143 = scmp.eq.s32.totalorder %s26, 0
      %p144 = por %p142, %p143
      %s145 = ssub.s32 %s27, %s46
      %s146 = ssub.s32 %s28, %s42
      %s147 = sor.u32 %s145, %s146
      %p148 = scmp.eq.s32.totalorder %s147, 0
      %s150 = sadd.s32 %s149, 1
      %s151 = scalar_select %p148, %s149, %s150
      %p154 = pneg %p148
      %p155 = scmp.eq.s32.totalorder %s20, 1
      %p156 = por %p154, %p155
      %p157 = scmp.ne.s32.totalorder %s149, %s152
      %p158 = scmp.eq.s32.totalorder %s20, 0
      %p159 = por %p157, %p158
      %p160 = scmp.ne.s32.totalorder %s149, %s152
      %p161 = scmp.eq.s32.totalorder %s25, 1
      %p162 = por %p160, %p161
      %p163 = scmp.ne.s32.totalorder %s152, %s153
      %p164 = scmp.eq.s32.totalorder %s25, 0
      %p165 = por %p163, %p164
      %p166 = scmp.ne.s32.totalorder %s152, %s153
      %p167 = scmp.eq.s32.totalorder %s26, 1
      %p168 = por %p166, %p167
      %p170 = scmp.ne.s32.totalorder %s153, %s169
      %p171 = scmp.eq.s32.totalorder %s26, 0
      %p172 = por %p170, %p171
      %p173 = scmp.le.s32.totalorder 1, %s20
      %p174 = scmp.lt.s32.totalorder %s20, 3
      %p175 = pnand %p173, %p174
      %p176 = pneg %p175
      // Predicated region
      $region9: #{self_attention.1} parent=5 // pred_check
        _
      $region10: #{self_attention.1} parent=5 // pred_check_branch
        %178 = sbr.rel (%p175) target = $region12
      $region11: #{self_attention.1} parent=5 // pred_region
        %s179 = ssub.s32 %s20, 1
        // Predicated region
        $region13: #{self_attention.1} parent=11 // pred_check
          %p180 = pneg %p116
        $region14: #{self_attention.1} parent=11 // pred_check_branch
          %182 = sbr.rel (%p180) target = $region16
        $region15: #{self_attention.1} parent=11 // pred_region
          %s184 = ssub.s32 1152, 1152
          %185 = vsyncadd [#allocation9], %s184
          %s186 = sshll.u32 [#allocation10], 4
          %s187 = int_to_ptr.vmem [resolvable:$true] %s186
          %192 = dma.hbm_to_vmem [thread:$0]  %s2, 1152, %s187, [#allocation9], 128, 128, 8
        $region16: #{self_attention.1} parent=11 // pred_fallthru
          _
        // Predicated region
        $region17: #{self_attention.1} parent=11 // pred_check
          %p193 = pneg %p137
        $region18: #{self_attention.1} parent=11 // pred_check_branch
          %195 = sbr.rel (%p193) target = $region20
        $region19: #{self_attention.1} parent=11 // pred_region
          %s197 = ssub.s32 512, 512
          %198 = vsyncadd [#allocation12], %s197
          %s199 = sshll.u32 [#allocation11], 4
          %s200 = int_to_ptr.vmem [resolvable:$true] %s199
          %205 = dma.hbm_to_vmem [thread:$0]  %s3, 512, %s200, [#allocation12], 128, 128, 8
        $region20: #{self_attention.1} parent=11 // pred_fallthru
          _
      $region12: #{self_attention.1} parent=5 // pred_fallthru
        _
      %p206 = scmp.lt.s32.totalorder %s20, 2
      // Predicated region
      $region21: #{self_attention.1} parent=5 // pred_check
        %p207 = pneg %p206
      $region22: #{self_attention.1} parent=5 // pred_check_branch
        %209 = sbr.rel (%p207) target = $region24
      $region23: #{self_attention.1} parent=5 // pred_region
        // Predicated region
        $region25: #{self_attention.1} parent=23 // pred_check
          %p210 = pneg %p61
        $region26: #{self_attention.1} parent=23 // pred_check_branch
          %212 = sbr.rel (%p210) target = $region28
        $region27: #{self_attention.1} parent=23 // pred_region
          %s213 = sand.u32 %s51, 1
          %s214 = scalar_lea.sflag [#allocation6], %s213
          %s215 = sand.u32 %s51, 1
          %s216 = smul.addr %s215, 32
          %s217 = scalar_lea.vmem [#allocation5], %s216
          %s219 = ssub.s32 512, 512
          %220 = vsyncadd %s214, %s219
          %s221 = smul.addr %s27, 4
          %s222 = sadd.s32 %s28, %s221
          %s223 = smul.addr %s222, 128
          %s224 = scalar_lea.hbm %s0, %s223
          %s225 = sshll.u32 %s217, 4
          %s226 = int_to_ptr.vmem [resolvable:$true] %s225
          %231 = dma.hbm_to_vmem [thread:$0]  %s224, 512, %s226, %s214, 128, 128, 8
        $region28: #{self_attention.1} parent=23 // pred_fallthru
          _
        // Predicated region
        $region29: #{self_attention.1} parent=23 // pred_check
          %p232 = pneg %p89
        $region30: #{self_attention.1} parent=23 // pred_check_branch
          %234 = sbr.rel (%p232) target = $region32
        $region31: #{self_attention.1} parent=23 // pred_region
          %s235 = sand.u32 %s20, 1
          %s236 = scalar_lea.sflag [#allocation9], %s235
          %s237 = sand.u32 %s79, 1
          %s238 = smul.addr %s237, 32
          %s239 = scalar_lea.vmem [#allocation8], %s238
          %s241 = ssub.s32 512, 512
          %242 = vsyncadd %s236, %s241
          %s243 = smul.addr %s27, 4
          %s244 = sadd.s32 %s29, %s243
          %s245 = smul.addr %s244, 128
          %s246 = scalar_lea.hbm %s1, %s245
          %s247 = sshll.u32 %s239, 4
          %s248 = int_to_ptr.vmem [resolvable:$true] %s247
          %253 = dma.hbm_to_vmem [thread:$0]  %s246, 512, %s248, %s236, 128, 128, 8
        $region32: #{self_attention.1} parent=23 // pred_fallthru
          _
      $region24: #{self_attention.1} parent=5 // pred_fallthru
        _
      %p254 = scmp.le.s32.totalorder 1, %s20
      %p255 = scmp.lt.s32.totalorder %s20, 3
      %p256 = pnand %p254, %p255
      %p257 = pneg %p256
      // Predicated region
      $region33: #{self_attention.1} parent=5 // pred_check
        _
      $region34: #{self_attention.1} parent=5 // pred_check_branch
        %259 = sbr.rel (%p256) target = $region36
      $region35: #{self_attention.1} parent=5 // pred_region
        %s260 = ssub.s32 %s20, 1
        %s261 = sand.u32 %s54, 1
        %s262 = scalar_lea.sflag [#allocation6], %s261
        %s263 = sand.u32 %s54, 1
        %s264 = smul.addr %s263, 32
        %s265 = scalar_lea.vmem [#allocation5], %s264
        // Predicated region
        $region37: #{self_attention.1} parent=35 // pred_check
          %p266 = pneg %p67
        $region38: #{self_attention.1} parent=35 // pred_check_branch
          %268 = sbr.rel (%p266) target = $region40
        $region39: #{self_attention.1} parent=35 // pred_region
          %269 = dma.done %s262, 512
        $region40: #{self_attention.1} parent=35 // pred_fallthru
          _
        %s270 = sand.u32 %s25, 1
        %s271 = scalar_lea.sflag [#allocation9], %s270
        %s272 = sand.u32 %s82, 1
        %s273 = smul.addr %s272, 32
        %s274 = scalar_lea.vmem [#allocation8], %s273
        // Predicated region
        $region41: #{self_attention.1} parent=35 // pred_check
          %p275 = pneg %p95
        $region42: #{self_attention.1} parent=35 // pred_check_branch
          %277 = sbr.rel (%p275) target = $region44
        $region43: #{self_attention.1} parent=35 // pred_region
          %278 = dma.done %s271, 512
        $region44: #{self_attention.1} parent=35 // pred_fallthru
          _
        // Predicated region
        $region45: #{self_attention.1} parent=35 // pred_check
          %p279 = pneg %p116
        $region46: #{self_attention.1} parent=35 // pred_check_branch
          %281 = sbr.rel (%p279) target = $region48
        $region47: #{self_attention.1} parent=35 // pred_region
          %282 = dma.done [#allocation9], 1152
        $region48: #{self_attention.1} parent=35 // pred_fallthru
          _
        // Predicated region
        $region49: #{self_attention.1} parent=35 // pred_check
          %p283 = pneg %p137
        $region50: #{self_attention.1} parent=35 // pred_check_branch
          %285 = sbr.rel (%p283) target = $region52
        $region51: #{self_attention.1} parent=35 // pred_region
          %286 = dma.done [#allocation12], 512
        $region52: #{self_attention.1} parent=35 // pred_fallthru
          _
        %s287 = sand.u32 %s54, 1
        %s288 = scalar_lea.sflag [#allocation6], %s287
        %s289 = sand.u32 %s54, 1
        %s290 = smul.addr %s289, 32
        %s291 = scalar_lea.vmem [#allocation5], %s290
        %p292 = pneg %p67
        %p293 = pneg %p64
        %s294 = sand.u32 %s25, 1
        %s295 = scalar_lea.sflag [#allocation9], %s294
        %s296 = sand.u32 %s82, 1
        %s297 = smul.addr %s296, 32
        %s298 = scalar_lea.vmem [#allocation8], %s297
        %p299 = pneg %p95
        %p300 = pneg %p92
        %p301 = pneg %p116
        %p302 = pneg %p113
        %p303 = pneg %p137
        %p304 = pneg %p134
        %p305 = pneg %p165
        %p306 = pneg %p162
        %s307 = sand.u32 %s152, 1
        %s308 = scalar_lea.sflag [#allocation7], %s307
        %s309 = sand.u32 %s152, 1
        %s310 = smul.addr %s309, 32
        %s311 = scalar_lea.vmem [#allocation13], %s310
        %p313 = scmp.eq.s32.totalorder %s32, 0
        // Predicated region
        $region53: #{self_attention.1} parent=35 // pred_check
          %p314 = pneg %p313
        $region54: #{self_attention.1} parent=35 // pred_check_branch
          %316 = sbr.rel (%p314) target = $region56
        $region55: #{self_attention.1} parent=35 // pred_region
          %vm317 = vcmask 516096
          %318 = vst.msk [vmem:[#allocation2] sm:$0x1] %vm317, -inf
          %319 = vst.msk [vmem:[#allocation3] sm:$0x1] %vm317, 0.0
          %vm320 = vcmask 523264
          %321 = vst.msk [vmem:[#allocation4] sm:$0xff] %vm320, 0.0
          %322 = vst.msk [vmem:[#allocation4 + $0x8] sm:$0xff] %vm320, 0.0
          %323 = vst.msk [vmem:[#allocation4 + $0x10] sm:$0xff] %vm320, 0.0
          %324 = vst.msk [vmem:[#allocation4 + $0x18] sm:$0xff] %vm320, 0.0
        $region56: #{self_attention.1} parent=35 // pred_fallthru
          _
        %v325 = vld [vmem:[%s274] sm:$0xff]
        %v326 = vld [vmem:[%s274 + $0x8] sm:$0xff]
        %v327 = vld [vmem:[%s274 + $0x10] sm:$0xff]
        %v328 = vld [vmem:[%s274 + $0x18] sm:$0xff]
        %v329 = vld [vmem:[#allocation10] sm:$0xff]
        %v330 = vld [vmem:[#allocation10 + $0x8] sm:$0xff]
        %v331 = vld [vmem:[#allocation10 + $0x10] sm:$0xff]
        %v332 = vld [vmem:[#allocation10 + $0x18] sm:$0xff]
        %v333 = vld [vmem:[#allocation10 + $0x20] sm:$0xff]
        %v334 = vld [vmem:[#allocation10 + $0x28] sm:$0xff]
        %v335 = vld [vmem:[#allocation10 + $0x30] sm:$0xff]
        %v336 = vld [vmem:[#allocation10 + $0x38] sm:$0xff]
        %v337 = vld [vmem:[#allocation10 + $0x40] sm:$0xff]
        %vm338 = vcmask 261120
        %v340 = vsel %vm338, %v329, 0
        %v343 = vsel %vm338, %v330, 0
        %v346 = vsel %vm338, %v331, 0
        %v349 = vsel %vm338, %v332, 0
        %v352 = vsel %vm338, %v333, 0
        %v355 = vsel %vm338, %v334, 0
        %v358 = vsel %vm338, %v335, 0
        %v361 = vsel %vm338, %v336, 0
        %v364 = vsel %vm338, %v337, 0
        %366 = vmatprep.subr.mxu0 0.0
        %367 = vmatpush1.msra.mxu0 %v325
        %368 = vmatprep.subr.mxu0 0.0
        %369 = vmatpush1.msra.mxu0 %v326
        %370 = vmatprep.subr.mxu0 0.0
        %371 = vmatpush1.msra.mxu0 %v327
        %372 = vmatprep.subr.mxu0 0.0
        %373 = vmatpush1.msra.mxu0 %v328
        %374 = vmatprep.subr.mxu0 0.0
        %375 = vmatpush1.msra.mxu0 0.0
        %376 = vmatprep.subr.mxu0 0.0
        %377 = vmatpush1.msra.mxu0 0.0
        %378 = vmatprep.subr.mxu0 0.0
        %379 = vmatpush1.msra.mxu0 0.0
        %380 = vmatprep.subr.mxu0 0.0
        %381 = vmatpush1.msra.mxu0 0.0
        %382 = vmatprep.subr.mxu0 0.0
        %383 = vmatpush1.msra.mxu0 0.0
        %384 = vmatprep.subr.mxu0 0.0
        %385 = vmatpush1.msra.mxu0 0.0
        %386 = vmatprep.subr.mxu0 0.0
        %387 = vmatpush1.msra.mxu0 0.0
        %388 = vmatprep.subr.mxu0 0.0
        %389 = vmatpush1.msra.mxu0 0.0
        %390 = vmatprep.subr.mxu0 0.0
        %391 = vmatpush1.msra.mxu0 0.0
        %392 = vmatprep.subr.mxu0 0.0
        %393 = vmatpush1.msra.mxu0 0.0
        %394 = vmatprep.subr.mxu0 0.0
        %395 = vmatpush1.msra.mxu0 0.0
        %396 = vmatprep.subr.mxu0 0.0
        %397 = vmatpush1.msra.mxu0 0.0
        %398 = vmatprep.subr.mxu0 0.0
        %399 = vmatpush1.msra.mxu0 0.0
        %400 = vmatprep.subr.mxu0 0.0
        %401 = vmatpush1.msra.mxu0 0.0
        %402 = vmatprep.subr.mxu0 0.0
        %403 = vmatpush1.msra.mxu0 0.0
        %404 = vmatprep.subr.mxu0 0.0
        %405 = vmatpush1.msra.mxu0 0.0
        %406 = vmatprep.subr.mxu0 0.0
        %407 = vmatpush1.msra.mxu0 0.0
        %408 = vmatprep.subr.mxu0 0.0
        %409 = vmatpush1.msra.mxu0 0.0
        %410 = vmatprep.subr.mxu0 0.0
        %411 = vmatpush1.msra.mxu0 0.0
        %412 = vmatprep.subr.mxu0 0.0
        %413 = vmatpush1.msra.mxu0 0.0
        %414 = vmatprep.subr.mxu0 0.0
        %415 = vmatpush1.msra.mxu0 0.0
        %416 = vmatprep.subr.mxu0 0.0
        %417 = vmatpush1.msra.mxu0 0.0
        %418 = vmatprep.subr.mxu0 0.0
        %419 = vmatpush1.msra.mxu0 0.0
        %420 = vmatprep.subr.mxu0 0.0
        %421 = vmatpush1.msra.mxu0 0.0
        %422 = vmatprep.subr.mxu0 0.0
        %423 = vmatpush1.msra.mxu0 0.0
        %424 = vmatprep.subr.mxu0 0.0
        %425 = vmatpush1.msra.mxu0 0.0
        %426 = vmatprep.subr.mxu0 0.0
        %427 = vmatpush1.msra.mxu0 0.0
        %428 = vmatprep.subr.mxu0 0.0
        %429 = vmatpush1.msra.mxu0 0.0
        %430 = vmatprep.mubr.f32.mxu0 0.0
        %431 = vmatmul.mubr.f32.gmra.mrb[0].mxu0 %v340
        %v432 = vpop.f32.mrb[0].mxu0
        %v433 = vadd.f32 0.0, %v432
        %v434 = vpop.f32.mrb[0].mxu0
        %435 = vmatprep.mubr.f32.mxu0 0.0
        %436 = vmatmul.mubr.f32.gmra.mrb[0].mxu0 %v343
        %v437 = vpop.f32.mrb[0].mxu0
        %v438 = vadd.f32 0.0, %v437
        %v439 = vpop.f32.mrb[0].mxu0
        %440 = vmatprep.mubr.f32.mxu0 0.0
        %441 = vmatmul.mubr.f32.gmra.mrb[0].mxu0 %v346
        %v442 = vpop.f32.mrb[0].mxu0
        %v443 = vadd.f32 0.0, %v442
        %v444 = vpop.f32.mrb[0].mxu0
        %445 = vmatprep.mubr.f32.mxu0 0.0
        %446 = vmatmul.mubr.f32.gmra.mrb[0].mxu0 %v349
        %v447 = vpop.f32.mrb[0].mxu0
        %v448 = vadd.f32 0.0, %v447
        %v449 = vpop.f32.mrb[0].mxu0
        %450 = vmatprep.mubr.f32.mxu0 0.0
        %451 = vmatmul.mubr.f32.gmra.mrb[0].mxu0 %v352
        %v452 = vpop.f32.mrb[0].mxu0
        %v453 = vadd.f32 0.0, %v452
        %v454 = vpop.f32.mrb[0].mxu0
        %455 = vmatprep.mubr.f32.mxu0 0.0
        %456 = vmatmul.mubr.f32.gmra.mrb[0].mxu0 %v355
        %v457 = vpop.f32.mrb[0].mxu0
        %v458 = vadd.f32 0.0, %v457
        %v459 = vpop.f32.mrb[0].mxu0
        %460 = vmatprep.mubr.f32.mxu0 0.0
        %461 = vmatmul.mubr.f32.gmra.mrb[0].mxu0 %v358
        %v462 = vpop.f32.mrb[0].mxu0
        %v463 = vadd.f32 0.0, %v462
        %v464 = vpop.f32.mrb[0].mxu0
        %465 = vmatprep.mubr.f32.mxu0 0.0
        %466 = vmatmul.mubr.f32.gmra.mrb[0].mxu0 %v361
        %v467 = vpop.f32.mrb[0].mxu0
        %v468 = vadd.f32 0.0, %v467
        %v469 = vpop.f32.mrb[0].mxu0
        %470 = vmatprep.mubr.f32.mxu0 0.0
        %471 = vmatmul.mubr.f32.gmra.mrb[0].mxu0 %v364
        %v472 = vpop.f32.mrb[0].mxu0
        %v473 = vadd.f32 0.0, %v472
        %v474 = vpop.f32.mrb[0].mxu0
        %475 = vdwg.mxu0
        %v476 = vpack.c.bf16 %v438, %v433
        %v477 = vpack.c.bf16 %v448, %v443
        %v478 = vpack.c.bf16 %v453, %v453
        %v479 = vpack.c.bf16 %v463, %v458
        %v480 = vpack.c.bf16 %v473, %v468
        %v481 = vld [vmem:[%s265] sm:$0xff]
        %v482 = vld [vmem:[%s265 + $0x8] sm:$0xff]
        %v483 = vld [vmem:[%s265 + $0x10] sm:$0xff]
        %v484 = vld [vmem:[%s265 + $0x18] sm:$0xff]
        %v485 = vlaneseq
        %v486 = vshrl.u32 %v485, 7
        %vm487 = vcmp.eq.s32.totalorder %v486, 0
        %v488 = vsel %vm487, 1, 0
        %v489 = vcvt.s32.f32 %v488
        %v490 = vpack.c.bf16 %v482, %v481
        %v491 = vpack.c.bf16 %v484, %v483
        %v492 = vpack.c.bf16 %v489, %v489
        %493 = vxpose.xlu0.c.b16.start [1/8] %v476, 128
        %494 = vxpose.xlu0.c.b16.cont [2/8] %v477, 128
        %495 = vxpose.xlu0.c.b16.cont [3/8] %v478, 128
        %496 = vxpose.xlu0.c.b16.cont [4/8] 0, 128
        %497 = vxpose.xlu0.c.b16.cont [5/8] 0, 128
        %498 = vxpose.xlu0.c.b16.cont [6/8] 0, 128
        %499 = vxpose.xlu0.c.b16.cont [7/8] 0, 128
        %500 = vxpose.xlu0.c.b16.end [8/8] 0, 128
        %v501 = vpop.trf.xlu0
        %v502 = vpop.trf.xlu0
        %v503 = vpop.trf.xlu0
        %v504 = vpop.trf.xlu0
        %v505 = vpop.trf.xlu0
        %v506 = vpop.trf.xlu0
        %v507 = vpop.trf.xlu0
        %v508 = vpop.trf.xlu0
        %vm509 = vcmask 326656
        %v511 = vsel %vm509, %v501, 0
        %v514 = vsel %vm509, %v502, 0
        %v517 = vsel %vm509, %v503, 0
        %v520 = vsel %vm509, %v504, 0
        %vm522 = vcmask 1043456
        %v524 = vsel %vm522, %v492, 0
        %526 = vmatprep.subr.bf16.mxu0 0
        %527 = vmatpush1.bf16.msra.mxu0 %v490
        %528 = vmatprep.subr.bf16.mxu0 0
        %529 = vmatpush1.bf16.msra.mxu0 %v491
        %530 = vmatprep.subr.bf16.mxu0 0
        %531 = vmatpush1.bf16.msra.mxu0 %v524
        %532 = vmatprep.subr.bf16.mxu0 0
        %533 = vmatpush1.bf16.msra.mxu0 0
        %534 = vmatprep.subr.bf16.mxu0 0
        %535 = vmatpush1.bf16.msra.mxu0 0
        %536 = vmatprep.subr.bf16.mxu0 0
        %537 = vmatpush1.bf16.msra.mxu0 0
        %538 = vmatprep.subr.bf16.mxu0 0
        %539 = vmatpush1.bf16.msra.mxu0 0
        %540 = vmatprep.subr.bf16.mxu0 0
        %541 = vmatpush1.bf16.msra.mxu0 0
        %542 = vmatprep.subr.bf16.mxu0 0
        %543 = vmatpush1.bf16.msra.mxu0 0
        %544 = vmatprep.subr.bf16.mxu0 0
        %545 = vmatpush1.bf16.msra.mxu0 0
        %546 = vmatprep.subr.bf16.mxu0 0
        %547 = vmatpush1.bf16.msra.mxu0 0
        %548 = vmatprep.subr.bf16.mxu0 0
        %549 = vmatpush1.bf16.msra.mxu0 0
        %550 = vmatprep.subr.bf16.mxu0 0
        %551 = vmatpush1.bf16.msra.mxu0 0
        %552 = vmatprep.subr.bf16.mxu0 0
        %553 = vmatpush1.bf16.msra.mxu0 0
        %554 = vmatprep.subr.bf16.mxu0 0
        %555 = vmatpush1.bf16.msra.mxu0 0
        %556 = vmatprep.subr.bf16.mxu0 0
        %557 = vmatpush1.bf16.msra.mxu0 0
        %558 = vmatprep.mubr.bf16.mxu0 0
        %559 = vmatmul.mubr.bf16.gmra.mrb[0].mxu0 %v511
        %v560 = vpop.f32.mrb[0].mxu0
        %v561 = vadd.f32 0.0, %v560
        %v562 = vpop.f32.mrb[0].mxu0
        %v563 = vpop.f32.mrb[0].mxu0
        %v564 = vadd.f32 0.0, %v563
        %v565 = vpop.f32.mrb[0].mxu0
        %566 = vmatprep.mubr.bf16.mxu0 0
        %567 = vmatmul.mubr.bf16.gmra.mrb[0].mxu0 %v514
        %v568 = vpop.f32.mrb[0].mxu0
        %v569 = vadd.f32 0.0, %v568
        %v570 = vpop.f32.mrb[0].mxu0
        %v571 = vpop.f32.mrb[0].mxu0
        %v572 = vadd.f32 0.0, %v571
        %v573 = vpop.f32.mrb[0].mxu0
        %574 = vmatprep.mubr.bf16.mxu0 0
        %575 = vmatmul.mubr.bf16.gmra.mrb[0].mxu0 %v517
        %v576 = vpop.f32.mrb[0].mxu0
        %v577 = vadd.f32 0.0, %v576
        %v578 = vpop.f32.mrb[0].mxu0
        %v579 = vpop.f32.mrb[0].mxu0
        %v580 = vadd.f32 0.0, %v579
        %v581 = vpop.f32.mrb[0].mxu0
        %582 = vmatprep.mubr.bf16.mxu0 0
        %583 = vmatmul.mubr.bf16.gmra.mrb[0].mxu0 %v520
        %v584 = vpop.f32.mrb[0].mxu0
        %v585 = vadd.f32 0.0, %v584
        %v586 = vpop.f32.mrb[0].mxu0
        %v587 = vpop.f32.mrb[0].mxu0
        %v588 = vadd.f32 0.0, %v587
        %v589 = vpop.f32.mrb[0].mxu0
        %590 = vdwg.mxu0
        %v591 = vld [vmem:[#allocation2] sm:$0x1]
        %vm592 = vcmask 523264
        %v593 = vsel %vm592, %v561, -inf
        %v594 = vsel %vm592, %v564, -inf
        %v595 = vsel %vm592, %v569, -inf
        %v596 = vsel %vm592, %v572, -inf
        %v597 = vsel %vm592, %v577, -inf
        %v598 = vmax.f32 %v593, %v597
        %v599 = vsel %vm592, %v580, -inf
        %v600 = vmax.f32 %v594, %v599
        %v601 = vsel %vm592, %v585, -inf
        %v602 = vmax.f32 %v595, %v601
        %v603 = vsel %vm592, %v588, -inf
        %v604 = vmax.f32 %v596, %v603
        %v605 = vmax.f32 %v598, %v600
        %v606 = vmax.f32 %v602, %v604
        %v607 = vmax.f32 %v605, %v606
        %v608 = vrot.slane %v607, 4
        %v609 = vmax.f32 %v607, %v608
        %v610 = vrot.slane %v609, 2
        %v611 = vmax.f32 %v609, %v610
        %v612 = vrot.slane %v611, 1
        %v613 = vmax.f32 %v611, %v612
        %v614 = vmax.f32 %v591, %v613
        %v615 = vsub.f32 %v591, %v614
        %v616 = vmul.f32 %v615, 1.442695
        %v617 = vpow.pop %v616
        %v619 = vlaneseq
        %v620 = vshrl.u32 %v619, 7
        %v621 = vsub.s32 0, %v620
        %v622 = vrot.slane %v614, %v621
        %v624 = vsub.f32 %v561, %v622
        %v625 = vsub.f32 %v564, %v622
        %v626 = vsub.f32 %v569, %v622
        %v627 = vsub.f32 %v572, %v622
        %v628 = vsub.f32 %v577, %v622
        %v629 = vsub.f32 %v580, %v622
        %v630 = vsub.f32 %v585, %v622
        %v631 = vsub.f32 %v588, %v622
        %v632 = vmul.f32 %v624, 1.442695
        %v633 = vpow.pop %v632
        %v634 = vmul.f32 %v625, 1.442695
        %v635 = vpow.pop %v634
        %v636 = vmul.f32 %v626, 1.442695
        %v637 = vpow.pop %v636
        %v638 = vmul.f32 %v627, 1.442695
        %v639 = vpow.pop %v638
        %v640 = vmul.f32 %v628, 1.442695
        %v641 = vpow.pop %v640
        %v642 = vmul.f32 %v629, 1.442695
        %v643 = vpow.pop %v642
        %v644 = vmul.f32 %v630, 1.442695
        %v645 = vpow.pop %v644
        %v646 = vmul.f32 %v631, 1.442695
        %v647 = vpow.pop %v646
        %v648 = vld [vmem:[#allocation3] sm:$0x1]
        %v649 = vmul.f32 %v617, %v648
        %v650 = vsel %vm592, %v633, 0.0
        %v651 = vsel %vm592, %v635, 0.0
        %v652 = vadd.f32 %v650, %v651
        %v653 = vsel %vm592, %v637, 0.0
        %v654 = vadd.f32 %v652, %v653
        %v655 = vsel %vm592, %v639, 0.0
        %v656 = vadd.f32 %v654, %v655
        %v657 = vsel %vm592, %v641, 0.0
        %v658 = vadd.f32 %v656, %v657
        %v659 = vsel %vm592, %v643, 0.0
        %v660 = vadd.f32 %v658, %v659
        %v661 = vsel %vm592, %v645, 0.0
        %v662 = vadd.f32 %v660, %v661
        %v663 = vsel %vm592, %v647, 0.0
        %v664 = vadd.f32 %v662, %v663
        %v665 = vrot.slane %v664, 4
        %v666 = vadd.f32 %v664, %v665
        %v667 = vrot.slane %v666, 2
        %v668 = vadd.f32 %v666, %v667
        %v669 = vrot.slane %v668, 1
        %v670 = vadd.f32 %v668, %v669
        %v671 = vadd.f32 %v649, %v670
        %vm672 = vcmask 516096
        %673 = vst.msk [vmem:[#allocation3] sm:$0x1] %vm672, %v671
        %v674 = vld [vmem:[#allocation4] sm:$0xff]
        %v675 = vld [vmem:[#allocation4 + $0x8] sm:$0xff]
        %v676 = vld [vmem:[#allocation4 + $0x10] sm:$0xff]
        %v677 = vld [vmem:[#allocation4 + $0x18] sm:$0xff]
        %v679 = vlaneseq
        %v680 = vshrl.u32 %v679, 7
        %v681 = vsub.s32 0, %v680
        %v682 = vrot.slane %v617, %v681
        %v684 = vmul.f32 %v682, %v674
        %v685 = vmul.f32 %v682, %v675
        %v686 = vmul.f32 %v682, %v676
        %v687 = vmul.f32 %v682, %v677
        %v688 = vpack.c.bf16 %v635, %v633
        %v689 = vpack.c.bf16 %v639, %v637
        %v690 = vpack.c.bf16 %v643, %v641
        %v691 = vpack.c.bf16 %v647, %v645
        %v693 = vsel %vm592, %v479, 0
        %v696 = vsel %vm592, %v480, 0
        %698 = vmatprep.subr.bf16.mxu0 0
        %699 = vmatpush1.bf16.msra.mxu0 %v688
        %700 = vmatprep.subr.bf16.mxu0 0
        %701 = vmatpush1.bf16.msra.mxu0 %v689
        %702 = vmatprep.subr.bf16.mxu0 0
        %703 = vmatpush1.bf16.msra.mxu0 %v690
        %704 = vmatprep.subr.bf16.mxu0 0
        %705 = vmatpush1.bf16.msra.mxu0 %v691
        %706 = vmatprep.subr.bf16.mxu0 0
        %707 = vmatpush1.bf16.msra.mxu0 0
        %708 = vmatprep.subr.bf16.mxu0 0
        %709 = vmatpush1.bf16.msra.mxu0 0
        %710 = vmatprep.subr.bf16.mxu0 0
        %711 = vmatpush1.bf16.msra.mxu0 0
        %712 = vmatprep.subr.bf16.mxu0 0
        %713 = vmatpush1.bf16.msra.mxu0 0
        %714 = vmatprep.subr.bf16.mxu0 0
        %715 = vmatpush1.bf16.msra.mxu0 0
        %716 = vmatprep.subr.bf16.mxu0 0
        %717 = vmatpush1.bf16.msra.mxu0 0
        %718 = vmatprep.subr.bf16.mxu0 0
        %719 = vmatpush1.bf16.msra.mxu0 0
        %720 = vmatprep.subr.bf16.mxu0 0
        %721 = vmatpush1.bf16.msra.mxu0 0
        %722 = vmatprep.subr.bf16.mxu0 0
        %723 = vmatpush1.bf16.msra.mxu0 0
        %724 = vmatprep.subr.bf16.mxu0 0
        %725 = vmatpush1.bf16.msra.mxu0 0
        %726 = vmatprep.subr.bf16.mxu0 0
        %727 = vmatpush1.bf16.msra.mxu0 0
        %728 = vmatprep.subr.bf16.mxu0 0
        %729 = vmatpush1.bf16.msra.mxu0 0
        %730 = vmatprep.mubr.bf16.mxu0 0
        %731 = vmatmul.mubr.bf16.gmra.mrb[0].mxu0 %v693
        %v732 = vpop.f32.mrb[0].mxu0
        %v733 = vadd.f32 0.0, %v732
        %v734 = vpop.f32.mrb[0].mxu0
        %v735 = vpop.f32.mrb[0].mxu0
        %v736 = vadd.f32 0.0, %v735
        %v737 = vpop.f32.mrb[0].mxu0
        %738 = vmatprep.mubr.bf16.mxu0 0
        %739 = vmatmul.mubr.bf16.gmra.mrb[0].mxu0 %v696
        %v740 = vpop.f32.mrb[0].mxu0
        %v741 = vadd.f32 0.0, %v740
        %v742 = vpop.f32.mrb[0].mxu0
        %v743 = vpop.f32.mrb[0].mxu0
        %v744 = vadd.f32 0.0, %v743
        %v745 = vpop.f32.mrb[0].mxu0
        %746 = vdwg.mxu0
        %v747 = vadd.f32 %v684, %v733
        %v748 = vadd.f32 %v685, %v736
        %v749 = vadd.f32 %v686, %v741
        %v750 = vadd.f32 %v687, %v744
        %751 = vst.msk [vmem:[#allocation4] sm:$0xff] %vm592, %v747
        %752 = vst.msk [vmem:[#allocation4 + $0x8] sm:$0xff] %vm592, %v748
        %753 = vst.msk [vmem:[#allocation4 + $0x10] sm:$0xff] %vm592, %v749
        %754 = vst.msk [vmem:[#allocation4 + $0x18] sm:$0xff] %vm592, %v750
        %755 = vst.msk [vmem:[#allocation2] sm:$0x1] %vm672, %v614
        // Predicated region
        $region57: #{self_attention.1} parent=35 // pred_check
          %p756 = pneg %p313
        $region58: #{self_attention.1} parent=35 // pred_check_branch
          %758 = sbr.rel (%p756) target = $region60
        $region59: #{self_attention.1} parent=35 // pred_region
          %v759 = vld [vmem:[#allocation3] sm:$0x1]
          %v760 = vrcp.pop %v759
          %v761 = vld [vmem:[#allocation4] sm:$0xff]
          %v762 = vld [vmem:[#allocation4 + $0x8] sm:$0xff]
          %v763 = vld [vmem:[#allocation4 + $0x10] sm:$0xff]
          %v764 = vld [vmem:[#allocation4 + $0x18] sm:$0xff]
          %v766 = vlaneseq
          %v767 = vshrl.u32 %v766, 7
          %v768 = vsub.s32 0, %v767
          %v769 = vrot.slane %v760, %v768
          %v771 = vmul.f32 %v761, %v769
          %v772 = vmul.f32 %v762, %v769
          %v773 = vmul.f32 %v763, %v769
          %v774 = vmul.f32 %v764, %v769
          %v775 = vld [vmem:[#allocation11] sm:$0xff]
          %v776 = vld [vmem:[#allocation11 + $0x8] sm:$0xff]
          %v777 = vld [vmem:[#allocation11 + $0x10] sm:$0xff]
          %v778 = vld [vmem:[#allocation11 + $0x18] sm:$0xff]
          %780 = vset.pattern.permute.xlu0 0
          %781 = vperm.xlu0 %780, %v775
          %v782 = vpop.permute.xlu0 %781
          %785 = vset.pattern.permute.xlu0 0
          %786 = vperm.xlu0 %785, %v776
          %v787 = vpop.permute.xlu0 %786
          %790 = vset.pattern.permute.xlu0 0
          %791 = vperm.xlu0 %790, %v777
          %v792 = vpop.permute.xlu0 %791
          %795 = vset.pattern.permute.xlu0 0
          %796 = vperm.xlu0 %795, %v778
          %v797 = vpop.permute.xlu0 %796
          %v799 = vadd.f32 %v771, %v782
          %v800 = vadd.f32 %v772, %v787
          %v801 = vadd.f32 %v773, %v792
          %v802 = vadd.f32 %v774, %v797
          %v803 = vld [vmem:[%s265] sm:$0xff]
          %v804 = vld [vmem:[%s265 + $0x8] sm:$0xff]
          %v805 = vld [vmem:[%s265 + $0x10] sm:$0xff]
          %v806 = vld [vmem:[%s265 + $0x18] sm:$0xff]
          %v807 = vadd.f32 %v799, %v803
          %v808 = vadd.f32 %v800, %v804
          %v809 = vadd.f32 %v801, %v805
          %v810 = vadd.f32 %v802, %v806
          %811 = vst.msk [vmem:[%s311] sm:$0xff] %vm592, %v807
          %812 = vst.msk [vmem:[%s311 + $0x8] sm:$0xff] %vm592, %v808
          %813 = vst.msk [vmem:[%s311 + $0x10] sm:$0xff] %vm592, %v809
          %814 = vst.msk [vmem:[%s311 + $0x18] sm:$0xff] %vm592, %v810
        $region60: #{self_attention.1} parent=35 // pred_fallthru
          _
        %s815 = sand.u32 %s152, 1
        %s816 = scalar_lea.sflag [#allocation7], %s815
        %s817 = sand.u32 %s152, 1
        %s818 = smul.addr %s817, 32
        %s819 = scalar_lea.vmem [#allocation13], %s818
        // Predicated region
        $region61: #{self_attention.1} parent=35 // pred_check
          %p820 = pneg %p162
        $region62: #{self_attention.1} parent=35 // pred_check_branch
          %822 = sbr.rel (%p820) target = $region64
        $region63: #{self_attention.1} parent=35 // pred_region
          %s824 = ssub.s32 512, 512
          %825 = vsyncadd %s816, %s824
          %s826 = smul.addr %s30, 4
          %s827 = sadd.s32 %s31, %s826
          %s828 = smul.addr %s827, 128
          %s829 = scalar_lea.hbm %s4, %s828
          %s830 = sshll.u32 %s819, 4
          %s831 = int_to_ptr.vmem [resolvable:$true] %s830
          %836 = dma.vmem_to_hbm [thread:$0]  %s831, 512, %s829, %s816, 128, 128, 8
        $region64: #{self_attention.1} parent=35 // pred_fallthru
          _
      $region36: #{self_attention.1} parent=5 // pred_fallthru
        _
      %p837 = scmp.le.s32.totalorder 2, %s20
      // Predicated region
      $region65: #{self_attention.1} parent=5 // pred_check
        %p838 = pneg %p837
      $region66: #{self_attention.1} parent=5 // pred_check_branch
        %840 = sbr.rel (%p838) target = $region68
      $region67: #{self_attention.1} parent=5 // pred_region
        %s841 = ssub.s32 %s20, 2
        // Predicated region
        $region69: #{self_attention.1} parent=67 // pred_check
          %p842 = pneg %p168
        $region70: #{self_attention.1} parent=67 // pred_check_branch
          %844 = sbr.rel (%p842) target = $region72
        $region71: #{self_attention.1} parent=67 // pred_region
          %s845 = sand.u32 %s153, 1
          %s846 = scalar_lea.sflag [#allocation7], %s845
          %s847 = sand.u32 %s153, 1
          %s848 = smul.addr %s847, 32
          %s849 = scalar_lea.vmem [#allocation13], %s848
          %850 = dma.done %s846, 512
        $region72: #{self_attention.1} parent=67 // pred_fallthru
          _
      $region68: #{self_attention.1} parent=5 // pred_fallthru
        _
    $region6: #{self_attention.1} parent=1 // loop_footer
      %s24 = sadd.s32 1, %s20
    $region7: #{self_attention.1} parent=1 // loop_footer_branch
      %19 = sbr.rel target = $region3
    $region8: #{self_attention.1} parent=1 // loop_exit
      _
    %851 = vsyncpa [#allocation6], 1
    %s852 = scalar_lea.sflag [#allocation6], 1
    %853 = vsyncpa %s852, 1
    %854 = vsyncpa [#allocation9], 1
    %s855 = scalar_lea.sflag [#allocation9], 1
    %856 = vsyncpa %s855, 1
    %857 = vsyncpa [#allocation12], 1
    %858 = vsyncpa [#allocation7], 1
    %s859 = scalar_lea.sflag [#allocation7], 1
    %860 = vsyncpa %s859, 1

</llo_original>
